<compile_context>
chip_gen: v7x
topology: tpu7x:2x2x1
jax: 0.10.0
libtpu: 0.0.40
codegen_flags: <defaults>
</compile_context>

<pallas_src>
import functools
import math

import numpy as np

import jax
import jax.numpy as jnp
from jax.experimental import pallas as pl
from jax.experimental.pallas import tpu as pltpu


def _round_up(v, m):
    return ((v + m - 1) // m) * m


def _hist_kernel(a_ref, b_ref, x_ref, o_ref, *, bins, ow_pad):
    """a_ref: (toh, th) bf16 row-pooling matrix; b_ref: (w_pad, ow_pad) bf16
    column-pooling matrix shared across bins; x_ref: (1, th, w_pad) f32 haloed
    input-row tile; o_ref: (toh, nb*ow_pad) f32 bin-major output tile
    (column = k*ow_pad + j)."""
    nb = len(bins)
    a = a_ref[...]                       # (toh, th) bf16, 0/1
    b = b_ref[...]                       # (w_pad, ow_pad) bf16, 0/1
    xw = x_ref[0]                        # (th, w_pad) f32

    for k in range(nb):                  # nb is small; unrolled at trace time
        # Interval indicator for bin k (module's break / leftover-k semantics).
        if nb == 1:
            m = jnp.ones(xw.shape, dtype=jnp.bfloat16)
        elif k == 0:
            m = (xw <= bins[0]).astype(jnp.bfloat16)
        elif k == nb - 1:
            m = (xw > bins[nb - 2]).astype(jnp.bfloat16)
        else:
            m = ((xw > bins[k - 1]) & (xw <= bins[k])).astype(jnp.bfloat16)

        # Stage 1: pool window rows.  Counts <= fh <= 256 -> exact in bf16.
        t = jnp.dot(a, m, preferred_element_type=jnp.float32)            # (toh, w_pad)
        # Stage 2: pool window columns with the bin-shared matrix B.
        o_ref[:, k * ow_pad:(k + 1) * ow_pad] = jnp.dot(
            t.astype(jnp.bfloat16), b, preferred_element_type=jnp.float32)


def hist_layer_forward(x, hist_bins, padding, stride, filt_dim, *, max_tile_oh=256):
    """Pallas implementation of HistLayer.forward for a 2-D image x -> (OH, OW, nb)."""
    H, W = x.shape
    s0, s1 = int(stride[0]), int(stride[1])
    fh, fw = int(filt_dim[0]), int(filt_dim[1])
    bins = sorted(float(b) for b in hist_bins)
    nb = len(bins)
    OH = math.floor((H - fh + 2 * padding) / s0) + 1
    OW = math.floor((W - fw + 2 * padding) / s1) + 1

    if padding != 0:
        raise NotImplementedError("HistLayer padding > 0 path is ill-defined in the "
                                  "reference module; only padding == 0 is supported.")
    assert fh <= 256, "bf16 stage-1 counts are exact only for filter heights <= 256"

    # Lane-dense padded widths (inputs and outputs both multiples of 128).
    w_pad = _round_up(W, 128)
    ow_pad = _round_up(OW, 128)

    def tile_rows(toh):
        return _round_up((toh - 1) * s0 + fh, 8)

    def vmem_footprint(toh):
        th = tile_rows(toh)
        x_in = 2 * th * w_pad * 4                     # double-buffered x tile (f32)
        a_in = 2 * toh * th * 2                       # A (bf16, constant block)
        b_in = 2 * w_pad * ow_pad * 2                 # B (bf16, constant block)
        out = 2 * toh * nb * ow_pad * 4               # double-buffered output tile
        inter = (th * w_pad * (4 + 2)                 # xw copy + one live mask
                 + toh * w_pad * (4 + 2)              # t (f32) + t (bf16)
                 + toh * ow_pad * 4)                  # per-bin output slab
        return x_in + a_in + b_in + out + inter

    # Output-row tiling: >= 2 grid steps when possible (v7x megacore), then shrink
    # until the per-step VMEM footprint fits the budget (safe on 64 MiB parts).
    cap = _round_up(max(8, max_tile_oh), 8)
    toh = min(cap, _round_up(OH, 8))
    if OH > 8:
        toh = min(toh, max(8, _round_up(-(-OH // 2), 8)))
    budget = 40 * 1024 * 1024
    while toh > 8 and vmem_footprint(toh) > budget:
        toh = max(8, _round_up(toh // 2, 8))

    th = tile_rows(toh)
    num_tiles = -(-OH // toh)
    h_need = (num_tiles - 1) * toh * s0 + th          # rows covered by the haloed tiles

    # Pad image (rows for halo/tail, columns to a lane-dense width) and build the
    # haloed row-tile view (num_tiles, th, w_pad) in HBM -- small duplication only.
    xf = x.astype(jnp.float32)
    xp = jnp.pad(xf, ((0, max(0, h_need - H)), (0, w_pad - W)))
    row_idx = (np.arange(num_tiles) * (toh * s0))[:, None] + np.arange(th)[None, :]
    x_tiles = xp[row_idx]                             # (num_tiles, th, w_pad)

    # Row-pooling matrix A (built once on host): A[o, r] = 1 iff r in [o*s0, o*s0+fh).
    o_i = np.arange(toh)[:, None]
    r_i = np.arange(th)[None, :]
    a_np = (r_i >= o_i * s0) & (r_i < o_i * s0 + fh)
    a_host = jnp.asarray(a_np.astype(np.float32), dtype=jnp.bfloat16)    # (toh, th)

    # Column-pooling matrix B shared across bins: B[w, j] = 1 iff j < OW and
    # w in [j*s1, j*s1+fw).  Padded columns of x never hit a nonzero row of B.
    w_i = np.arange(w_pad)[:, None]
    j_i = np.arange(ow_pad)[None, :]
    b_np = (j_i < OW) & (w_i >= j_i * s1) & (w_i < j_i * s1 + fw)
    b_host = jnp.asarray(b_np.astype(np.float32), dtype=jnp.bfloat16)    # (w_pad, ow_pad)

    vmem_limit = int(min(56 * 1024 * 1024,
                         max(32 * 1024 * 1024,
                             vmem_footprint(toh) + 12 * 1024 * 1024)))

    kernel = functools.partial(_hist_kernel, bins=tuple(bins), ow_pad=ow_pad)
    slab = pl.pallas_call(
        kernel,
        out_shape=jax.ShapeDtypeStruct((num_tiles * toh, nb * ow_pad), jnp.float32),
        grid=(num_tiles,),
        in_specs=[
            pl.BlockSpec((toh, th), lambda i: (0, 0)),             # A (constant block)
            pl.BlockSpec((w_pad, ow_pad), lambda i: (0, 0)),       # B (constant block)
            pl.BlockSpec((1, th, w_pad), lambda i: (i, 0, 0)),     # haloed x row-tile
        ],
        out_specs=pl.BlockSpec((toh, nb * ow_pad), lambda i: (i, 0)),
        compiler_params=pltpu.CompilerParams(
            dimension_semantics=("parallel",),
            vmem_limit_bytes=vmem_limit,
        ),
    )(a_host, b_host, x_tiles)

    # Bin-major columns (k*ow_pad + j): slice valid rows/cols, reshape, and fix the
    # (OH, OW, nb) interleave with a cheap wrapper-side transpose.
    out = slab[:OH].reshape(OH, nb, ow_pad)[:, :, :OW]
    return jnp.transpose(out, (0, 2, 1))


if __name__ == "__main__":
    # Small, deterministic configuration consistent with the module's __init__.
    D_in = (16, 16)
    padding = 0
    stride = (2, 2)
    filt_dim = (3, 3)
    hist_bins = [0.4, 0.8, 0.2, 0.6]   # unsorted on purpose; the module sorts them

    key = jax.random.PRNGKey(0)
    x = jax.random.uniform(key, D_in, dtype=jnp.float32)

    out = hist_layer_forward(x, hist_bins, padding, stride, filt_dim)
    out = jax.block_until_ready(out)

    # Pure numpy reference mirroring HistLayer.forward / bin_img exactly
    # (first bin with v <= bins[k] via break, leftover k == last bin otherwise).
    bins_sorted = [np.float32(b) for b in sorted(hist_bins)]
    nb = len(bins_sorted)
    s0, s1 = stride
    fh, fw = filt_dim
    OH = math.floor((D_in[0] - fh + 2 * padding) / s0) + 1
    OW = math.floor((D_in[1] - fw + 2 * padding) / s1) + 1
    xn = np.asarray(x)
    ref = np.zeros((OH, OW, nb), np.float32)
    for i in range(OH):
        for jj in range(OW):
            win = xn[i * s0:i * s0 + fh, jj * s1:jj * s1 + fw]
            for v in win.ravel():
                k = nb - 1                       # leftover loop index when no break
                for kk in range(nb):
                    if v <= bins_sorted[kk]:
                        k = kk
                        break
                ref[i, jj, k] += 1.0

    assert out.shape == (OH, OW, nb) == ref.shape
    assert np.allclose(np.asarray(out), ref, atol=1e-5), "Pallas output mismatch vs reference"
    print("KERNEL_OK")
</pallas_src>

<mosaic_0001>
module attributes {stable_mosaic.version = 11 : i64} {
  func.func @_hist_kernel(%arg0: i32, %arg1: memref<8x24xbf16, #tpu.memory_space<vmem>>, %arg2: memref<128x128xbf16, #tpu.memory_space<vmem>>, %arg3: memref<1x24x128xf32, #tpu.memory_space<vmem>>, %arg4: memref<8x512xf32, #tpu.memory_space<vmem>>) attributes {dimension_semantics = [#tpu.dimension_semantics<parallel>], iteration_bounds = array<i64: 1>, scalar_prefetch = 0 : i64, scratch_operands = 0 : i64, tpu.core_type = #tpu.core_type<tc>, window_params = [{pipeline_mode = #tpu.pipeline_mode<synchronous>, transform_indices = @transform_0, window_bounds = array<i64: 8, 24>}, {pipeline_mode = #tpu.pipeline_mode<synchronous>, transform_indices = @transform_1, window_bounds = array<i64: 128, 128>}, {transform_indices = @transform_2, window_bounds = array<i64: 1, 24, 128>}, {transform_indices = @transform_3, window_bounds = array<i64: 8, 512>}]} {
    %c0 = arith.constant 0 : index
    %c0_0 = arith.constant 0 : index
    %0 = vector.load %arg1[%c0, %c0_0] : memref<8x24xbf16, #tpu.memory_space<vmem>>, vector<8x24xbf16>
    %c0_1 = arith.constant 0 : index
    %c0_2 = arith.constant 0 : index
    %1 = vector.load %arg2[%c0_1, %c0_2] : memref<128x128xbf16, #tpu.memory_space<vmem>>, vector<128x128xbf16>
    %c0_3 = arith.constant 0 : index
    %c0_4 = arith.constant 0 : index
    %c0_5 = arith.constant 0 : index
    %2 = vector.load %arg3[%c0_3, %c0_4, %c0_5] : memref<1x24x128xf32, #tpu.memory_space<vmem>>, vector<1x24x128xf32>
    %3 = vector.shape_cast %2 : vector<1x24x128xf32> to vector<24x128xf32>
    %cst = arith.constant 2.000000e-01 : f32
    %4 = vector.broadcast %cst : f32 to vector<24x128xf32>
    %5 = arith.cmpf ole, %3, %4 : vector<24x128xf32>
    %6 = arith.extui %5 : vector<24x128xi1> to vector<24x128xi32>
    %7 = arith.sitofp %6 : vector<24x128xi32> to vector<24x128xf32>
    %8 = arith.truncf %7 : vector<24x128xf32> to vector<24x128xbf16>
    %cst_6 = arith.constant dense<0.000000e+00> : vector<8x128xf32>
    %9 = tpu.matmul %0, %8, %cst_6 {dimension_numbers = #tpu.dot_dimension_numbers<[1], [0], [0], [1], [0, 0, 1, 1], [], []>} : vector<8x24xbf16>, vector<24x128xbf16>, vector<8x128xf32> -> vector<8x128xf32>
    %10 = arith.truncf %9 : vector<8x128xf32> to vector<8x128xbf16>
    %cst_7 = arith.constant dense<0.000000e+00> : vector<8x128xf32>
    %11 = tpu.matmul %10, %1, %cst_7 {dimension_numbers = #tpu.dot_dimension_numbers<[1], [0], [0], [1], [0, 0, 1, 1], [], []>} : vector<8x128xbf16>, vector<128x128xbf16>, vector<8x128xf32> -> vector<8x128xf32>
    %c0_8 = arith.constant 0 : index
    %c0_9 = arith.constant 0 : index
    %12 = vector.load %arg4[%c0_8, %c0_9] : memref<8x512xf32, #tpu.memory_space<vmem>>, vector<8x128xf32>
    tpu.vector_store %arg4[%c0_8, %c0_9], %11 {strides = array<i32>} : memref<8x512xf32, #tpu.memory_space<vmem>>, vector<8x128xf32>,
    %cst_10 = arith.constant 2.000000e-01 : f32
    %13 = vector.broadcast %cst_10 : f32 to vector<24x128xf32>
    %14 = arith.cmpf ogt, %3, %13 : vector<24x128xf32>
    %cst_11 = arith.constant 4.000000e-01 : f32
    %15 = vector.broadcast %cst_11 : f32 to vector<24x128xf32>
    %16 = arith.cmpf ole, %3, %15 : vector<24x128xf32>
    %17 = arith.andi %14, %16 : vector<24x128xi1>
    %18 = arith.extui %17 : vector<24x128xi1> to vector<24x128xi32>
    %19 = arith.sitofp %18 : vector<24x128xi32> to vector<24x128xf32>
    %20 = arith.truncf %19 : vector<24x128xf32> to vector<24x128xbf16>
    %cst_12 = arith.constant dense<0.000000e+00> : vector<8x128xf32>
    %21 = tpu.matmul %0, %20, %cst_12 {dimension_numbers = #tpu.dot_dimension_numbers<[1], [0], [0], [1], [0, 0, 1, 1], [], []>} : vector<8x24xbf16>, vector<24x128xbf16>, vector<8x128xf32> -> vector<8x128xf32>
    %22 = arith.truncf %21 : vector<8x128xf32> to vector<8x128xbf16>
    %cst_13 = arith.constant dense<0.000000e+00> : vector<8x128xf32>
    %23 = tpu.matmul %22, %1, %cst_13 {dimension_numbers = #tpu.dot_dimension_numbers<[1], [0], [0], [1], [0, 0, 1, 1], [], []>} : vector<8x128xbf16>, vector<128x128xbf16>, vector<8x128xf32> -> vector<8x128xf32>
    %c0_14 = arith.constant 0 : index
    %c128 = arith.constant 128 : index
    %24 = vector.load %arg4[%c0_14, %c128] : memref<8x512xf32, #tpu.memory_space<vmem>>, vector<8x128xf32>
    tpu.vector_store %arg4[%c0_14, %c128], %23 {strides = array<i32>} : memref<8x512xf32, #tpu.memory_space<vmem>>, vector<8x128xf32>,
    %cst_15 = arith.constant 4.000000e-01 : f32
    %25 = vector.broadcast %cst_15 : f32 to vector<24x128xf32>
    %26 = arith.cmpf ogt, %3, %25 : vector<24x128xf32>
    %cst_16 = arith.constant 6.000000e-01 : f32
    %27 = vector.broadcast %cst_16 : f32 to vector<24x128xf32>
    %28 = arith.cmpf ole, %3, %27 : vector<24x128xf32>
    %29 = arith.andi %26, %28 : vector<24x128xi1>
    %30 = arith.extui %29 : vector<24x128xi1> to vector<24x128xi32>
    %31 = arith.sitofp %30 : vector<24x128xi32> to vector<24x128xf32>
    %32 = arith.truncf %31 : vector<24x128xf32> to vector<24x128xbf16>
    %cst_17 = arith.constant dense<0.000000e+00> : vector<8x128xf32>
    %33 = tpu.matmul %0, %32, %cst_17 {dimension_numbers = #tpu.dot_dimension_numbers<[1], [0], [0], [1], [0, 0, 1, 1], [], []>} : vector<8x24xbf16>, vector<24x128xbf16>, vector<8x128xf32> -> vector<8x128xf32>
    %34 = arith.truncf %33 : vector<8x128xf32> to vector<8x128xbf16>
    %cst_18 = arith.constant dense<0.000000e+00> : vector<8x128xf32>
    %35 = tpu.matmul %34, %1, %cst_18 {dimension_numbers = #tpu.dot_dimension_numbers<[1], [0], [0], [1], [0, 0, 1, 1], [], []>} : vector<8x128xbf16>, vector<128x128xbf16>, vector<8x128xf32> -> vector<8x128xf32>
    %c0_19 = arith.constant 0 : index
    %c256 = arith.constant 256 : index
    %36 = vector.load %arg4[%c0_19, %c256] : memref<8x512xf32, #tpu.memory_space<vmem>>, vector<8x128xf32>
    tpu.vector_store %arg4[%c0_19, %c256], %35 {strides = array<i32>} : memref<8x512xf32, #tpu.memory_space<vmem>>, vector<8x128xf32>,
    %cst_20 = arith.constant 6.000000e-01 : f32
    %37 = vector.broadcast %cst_20 : f32 to vector<24x128xf32>
    %38 = arith.cmpf ogt, %3, %37 : vector<24x128xf32>
    %39 = arith.extui %38 : vector<24x128xi1> to vector<24x128xi32>
    %40 = arith.sitofp %39 : vector<24x128xi32> to vector<24x128xf32>
    %41 = arith.truncf %40 : vector<24x128xf32> to vector<24x128xbf16>
    %cst_21 = arith.constant dense<0.000000e+00> : vector<8x128xf32>
    %42 = tpu.matmul %0, %41, %cst_21 {dimension_numbers = #tpu.dot_dimension_numbers<[1], [0], [0], [1], [0, 0, 1, 1], [], []>} : vector<8x24xbf16>, vector<24x128xbf16>, vector<8x128xf32> -> vector<8x128xf32>
    %43 = arith.truncf %42 : vector<8x128xf32> to vector<8x128xbf16>
    %cst_22 = arith.constant dense<0.000000e+00> : vector<8x128xf32>
    %44 = tpu.matmul %43, %1, %cst_22 {dimension_numbers = #tpu.dot_dimension_numbers<[1], [0], [0], [1], [0, 0, 1, 1], [], []>} : vector<8x128xbf16>, vector<128x128xbf16>, vector<8x128xf32> -> vector<8x128xf32>
    %c0_23 = arith.constant 0 : index
    %c384 = arith.constant 384 : index
    %45 = vector.load %arg4[%c0_23, %c384] : memref<8x512xf32, #tpu.memory_space<vmem>>, vector<8x128xf32>
    tpu.vector_store %arg4[%c0_23, %c384], %44 {strides = array<i32>} : memref<8x512xf32, #tpu.memory_space<vmem>>, vector<8x128xf32>,
    return
  }
  func.func @transform_0(%arg0: i32) -> (i32, i32) {
    %c0_i32 = arith.constant 0 : i32
    %c0_i32_0 = arith.constant 0 : i32
    %c0_i32_1 = arith.constant 0 : i32
    return %c0_i32, %c0_i32_0 : i32, i32
  }
  func.func @transform_1(%arg0: i32) -> (i32, i32) {
    %c0_i32 = arith.constant 0 : i32
    %c0_i32_0 = arith.constant 0 : i32
    %c0_i32_1 = arith.constant 0 : i32
    return %c0_i32, %c0_i32_0 : i32, i32
  }
  func.func @transform_2(%arg0: i32) -> (i32, i32, i32) {
    %c0_i32 = arith.constant 0 : i32
    %c0_i32_0 = arith.constant 0 : i32
    %c0_i32_1 = arith.constant 0 : i32
    return %arg0, %c0_i32, %c0_i32_0 : i32, i32, i32
  }
  func.func @transform_3(%arg0: i32) -> (i32, i32) {
    %c0_i32 = arith.constant 0 : i32
    %c0_i32_0 = arith.constant 0 : i32
    return %arg0, %c0_i32 : i32, i32
  }
}

</mosaic_0001>

<llo_original>
// kernel: tpu_custom_call.1
$region0: #{tpu_custom_call.1}
  #allocation0 [shape = 'u32[]', space=smem, size = 0x4, offset = 0x4, fixed_abs, tag = 'smem constant byte address 0x4 - core index']
  #allocation1 [shape = 'u32[144,128]{1,0:T(1,128)}', space=vmem, size = 0x12000, scoped, tag = 'internal scratch']
  %s0 = inlined_call_operand.hbm [shape: bf16[8,24], index: 0, kind: input, shape index: {}]
  %s1 = inlined_call_operand.hbm [shape: bf16[128,128], index: 1, kind: input, shape index: {}]
  %s2 = inlined_call_operand.hbm [shape: f32[1,24,128], index: 2, kind: input, shape index: {}]
  %s3 = inlined_call_operand.hbm [shape: f32[8,512], index: 3, kind: output, shape index: {}]
  %s4 = sld [smem:[#allocation0]]
  $region34: #{tpu_custom_call.1} parent=0
    _
  %s6 = ssub.s32 1, %s4
  %s7 = scalar_select 0, %s6, %s4
  $region1: #{tpu_custom_call.1} parent=0
    #allocation2 [shape = 'u8[2048]{0}', space=vmem, size = 0x800, scoped, tag = 'input window, operand 0, single buffered']
    #allocation3 [shape = 's32[1]{0}', space=sflag, size = 0x4, scoped, tag = 'scoped memory for tpu_custom_call.1']
    #allocation4 [shape = 's32[1]{0}', space=sflag, size = 0x4, scoped, tag = 'scoped memory for tpu_custom_call.1']
    #allocation5 [shape = 'u8[32768]{0}', space=vmem, size = 0x8000, scoped, tag = 'input window, operand 1, single buffered']
    #allocation6 [shape = 's32[1]{0}', space=sflag, size = 0x4, scoped, tag = 'scoped memory for tpu_custom_call.1']
    #allocation7 [shape = 'u8[12288]{0}', space=vmem, size = 0x3000, scoped, tag = 'input window, operand 2, single buffered']
    #allocation8 [shape = 'u8[16384]{0}', space=vmem, size = 0x4000, scoped, tag = 'output window, operand 0, single buffered']
    %8 = vsyncpa [#allocation3], 0
    %9 = vsyncpa [#allocation6], 0
    %10 = vsyncpa [#allocation4], 0
    // Predicated region
    $region2: #{tpu_custom_call.1} parent=1 // pred_check
      _
    $region3: #{tpu_custom_call.1} parent=1 // pred_check_branch
      %12 = sbr.rel (0) target = $region5
    $region4: #{tpu_custom_call.1} parent=1 // pred_region
      %s14 = ssub.s32 64, 64
      %15 = vsyncadd [#allocation3], %s14
      %s17 = sshll.u32 [#allocation2], 4
      %s18 = int_to_ptr.vmem [resolvable:$true] %s17
      %20 = dma.hbm_to_vmem [thread:$0]  %s0, 64, %s18, [#allocation3]
    $region5: #{tpu_custom_call.1} parent=1 // pred_fallthru
      _
    // Predicated region
    $region6: #{tpu_custom_call.1} parent=1 // pred_check
      _
    $region7: #{tpu_custom_call.1} parent=1 // pred_check_branch
      %22 = sbr.rel (0) target = $region9
    $region8: #{tpu_custom_call.1} parent=1 // pred_region
      %s24 = ssub.s32 1024, 1024
      %25 = vsyncadd [#allocation6], %s24
      %s26 = sshll.u32 [#allocation5], 4
      %s27 = int_to_ptr.vmem [resolvable:$true] %s26
      %32 = dma.hbm_to_vmem [thread:$0]  %s1, 1024, %s27, [#allocation6], 64, 64, 4
    $region9: #{tpu_custom_call.1} parent=1 // pred_fallthru
      _
    // Predicated region
    $region10: #{tpu_custom_call.1} parent=1 // pred_check
      _
    $region11: #{tpu_custom_call.1} parent=1 // pred_check_branch
      %34 = sbr.rel (0) target = $region13
    $region12: #{tpu_custom_call.1} parent=1 // pred_region
      %s36 = ssub.s32 384, 384
      %37 = vsyncadd [#allocation6], %s36
      %s38 = sshll.u32 [#allocation7], 4
      %s39 = int_to_ptr.vmem [resolvable:$true] %s38
      %44 = dma.hbm_to_vmem [thread:$0]  %s2, 384, %s39, [#allocation6], 128, 128, 8
    $region13: #{tpu_custom_call.1} parent=1 // pred_fallthru
      _
    // Predicated region
    $region14: #{tpu_custom_call.1} parent=1 // pred_check
      _
    $region15: #{tpu_custom_call.1} parent=1 // pred_check_branch
      %46 = sbr.rel (0) target = $region17
    $region16: #{tpu_custom_call.1} parent=1 // pred_region
      %47 = dma.done [#allocation3], 64
    $region17: #{tpu_custom_call.1} parent=1 // pred_fallthru
      _
    // Predicated region
    $region18: #{tpu_custom_call.1} parent=1 // pred_check
      _
    $region19: #{tpu_custom_call.1} parent=1 // pred_check_branch
      %49 = sbr.rel (0) target = $region21
    $region20: #{tpu_custom_call.1} parent=1 // pred_region
      %50 = dma.done [#allocation6], 1024
    $region21: #{tpu_custom_call.1} parent=1 // pred_fallthru
      _
    // Predicated region
    $region22: #{tpu_custom_call.1} parent=1 // pred_check
      _
    $region23: #{tpu_custom_call.1} parent=1 // pred_check_branch
      %52 = sbr.rel (0) target = $region25
    $region24: #{tpu_custom_call.1} parent=1 // pred_region
      %53 = dma.done [#allocation6], 384
    $region25: #{tpu_custom_call.1} parent=1 // pred_fallthru
      _
    %v55 = vld [vmem:[#allocation2] sm:$0xf]
    %v56 = vld [vmem:[#allocation5] sm:$0xf]
    %v57 = vld [vmem:[#allocation5 + $0x4] sm:$0xf]
    %v58 = vld [vmem:[#allocation5 + $0x8] sm:$0xf]
    %v59 = vld [vmem:[#allocation5 + $0xc] sm:$0xf]
    %v60 = vld [vmem:[#allocation5 + $0x10] sm:$0xf]
    %v61 = vld [vmem:[#allocation5 + $0x14] sm:$0xf]
    %v62 = vld [vmem:[#allocation5 + $0x18] sm:$0xf]
    %v63 = vld [vmem:[#allocation5 + $0x1c] sm:$0xf]
    %v64 = vld [vmem:[#allocation5 + $0x20] sm:$0xf]
    %v65 = vld [vmem:[#allocation5 + $0x24] sm:$0xf]
    %v66 = vld [vmem:[#allocation5 + $0x28] sm:$0xf]
    %v67 = vld [vmem:[#allocation5 + $0x2c] sm:$0xf]
    %v68 = vld [vmem:[#allocation5 + $0x30] sm:$0xf]
    %v69 = vld [vmem:[#allocation5 + $0x34] sm:$0xf]
    %v70 = vld [vmem:[#allocation5 + $0x38] sm:$0xf]
    %v71 = vld [vmem:[#allocation5 + $0x3c] sm:$0xf]
    %v72 = vld [vmem:[#allocation7] sm:$0xff]
    %v73 = vld [vmem:[#allocation7 + $0x8] sm:$0xff]
    %v74 = vld [vmem:[#allocation7 + $0x10] sm:$0xff]
    %vm75 = vcmp.le.f32.partialorder %v72, 0.2
    %vm76 = vcmp.le.f32.partialorder %v73, 0.2
    %vm77 = vcmp.le.f32.partialorder %v74, 0.2
    %v78 = vsel %vm75, 1, 0
    %v79 = vsel %vm76, 1, 0
    %v80 = vsel %vm77, 1, 0
    %v81 = vcvt.s32.f32 %v78
    %v82 = vcvt.s32.f32 %v79
    %v83 = vcvt.s32.f32 %v80
    %v84 = vpack.c.bf16 %v82, %v81
    %v85 = vpack.c.bf16 %v83, %v83
    %vm86 = vcmask 195584
    %v88 = vsel %vm86, %v55, 0
    %vm90 = vcmask 1043456
    %v92 = vsel %vm90, %v85, 0
    %94 = vmatprep.subr.bf16.mxu0 0
    %95 = vmatpush1.bf16.msra.mxu0 %v84
    %96 = vmatprep.subr.bf16.mxu0 0
    %97 = vmatpush1.bf16.msra.mxu0 %v92
    %98 = vmatprep.subr.bf16.mxu0 0
    %99 = vmatpush1.bf16.msra.mxu0 0
    %100 = vmatprep.subr.bf16.mxu0 0
    %101 = vmatpush1.bf16.msra.mxu0 0
    %102 = vmatprep.subr.bf16.mxu0 0
    %103 = vmatpush1.bf16.msra.mxu0 0
    %104 = vmatprep.subr.bf16.mxu0 0
    %105 = vmatpush1.bf16.msra.mxu0 0
    %106 = vmatprep.subr.bf16.mxu0 0
    %107 = vmatpush1.bf16.msra.mxu0 0
    %108 = vmatprep.subr.bf16.mxu0 0
    %109 = vmatpush1.bf16.msra.mxu0 0
    %110 = vmatprep.subr.bf16.mxu0 0
    %111 = vmatpush1.bf16.msra.mxu0 0
    %112 = vmatprep.subr.bf16.mxu0 0
    %113 = vmatpush1.bf16.msra.mxu0 0
    %114 = vmatprep.subr.bf16.mxu0 0
    %115 = vmatpush1.bf16.msra.mxu0 0
    %116 = vmatprep.subr.bf16.mxu0 0
    %117 = vmatpush1.bf16.msra.mxu0 0
    %118 = vmatprep.subr.bf16.mxu0 0
    %119 = vmatpush1.bf16.msra.mxu0 0
    %120 = vmatprep.subr.bf16.mxu0 0
    %121 = vmatpush1.bf16.msra.mxu0 0
    %122 = vmatprep.subr.bf16.mxu0 0
    %123 = vmatpush1.bf16.msra.mxu0 0
    %124 = vmatprep.subr.bf16.mxu0 0
    %125 = vmatpush1.bf16.msra.mxu0 0
    %126 = vmatprep.mubr.bf16.mxu0 0
    %127 = vmatmul.mubr.bf16.gmra.mrb[0].mxu0 %v88
    %v128 = vpop.f32.mrb[0].mxu0
    %v129 = vadd.f32 0.0, %v128
    %v130 = vpop.f32.mrb[0].mxu0
    %v131 = vpop.f32.mrb[0].mxu0
    %v132 = vpop.f32.mrb[0].mxu0
    %133 = vdwg.mxu0
    %v134 = vpack.c.bf16 %v129, %v129
    %v151 = vunpack.c.l.b16 %v56
    %v152 = vunpack.c.l.b16 %v57
    %v153 = vunpack.c.l.b16 %v58
    %v154 = vunpack.c.l.b16 %v59
    %v155 = vunpack.c.l.b16 %v60
    %v156 = vunpack.c.l.b16 %v61
    %v157 = vunpack.c.l.b16 %v62
    %v158 = vunpack.c.l.b16 %v63
    %v159 = vunpack.c.l.b16 %v64
    %v160 = vunpack.c.l.b16 %v65
    %v161 = vunpack.c.l.b16 %v66
    %v162 = vunpack.c.l.b16 %v67
    %v163 = vunpack.c.l.b16 %v68
    %v164 = vunpack.c.l.b16 %v69
    %v165 = vunpack.c.l.b16 %v70
    %v166 = vunpack.c.l.b16 %v71
    %v167 = vpack.c.b16 %v152, %v151
    %v168 = vpack.c.b16 %v154, %v153
    %v169 = vpack.c.b16 %v156, %v155
    %v170 = vpack.c.b16 %v158, %v157
    %v171 = vpack.c.b16 %v160, %v159
    %v172 = vpack.c.b16 %v162, %v161
    %v173 = vpack.c.b16 %v164, %v163
    %v174 = vpack.c.b16 %v166, %v165
    %183 = vmatprep.subr.bf16.mxu0 0
    %184 = vmatpush1.bf16.msra.mxu0 %v167
    %185 = vmatprep.subr.bf16.mxu0 0
    %186 = vmatpush1.bf16.msra.mxu0 %v168
    %187 = vmatprep.subr.bf16.mxu0 0
    %188 = vmatpush1.bf16.msra.mxu0 %v169
    %189 = vmatprep.subr.bf16.mxu0 0
    %190 = vmatpush1.bf16.msra.mxu0 %v170
    %191 = vmatprep.subr.bf16.mxu0 0
    %192 = vmatpush1.bf16.msra.mxu0 %v171
    %193 = vmatprep.subr.bf16.mxu0 0
    %194 = vmatpush1.bf16.msra.mxu0 %v172
    %195 = vmatprep.subr.bf16.mxu0 0
    %196 = vmatpush1.bf16.msra.mxu0 %v173
    %197 = vmatprep.subr.bf16.mxu0 0
    %198 = vmatpush1.bf16.msra.mxu0 %v174
    %199 = vmatprep.subr.bf16.mxu0 0
    %200 = vmatpush1.bf16.msra.mxu0 0
    %201 = vmatprep.subr.bf16.mxu0 0
    %202 = vmatpush1.bf16.msra.mxu0 0
    %203 = vmatprep.subr.bf16.mxu0 0
    %204 = vmatpush1.bf16.msra.mxu0 0
    %205 = vmatprep.subr.bf16.mxu0 0
    %206 = vmatpush1.bf16.msra.mxu0 0
    %207 = vmatprep.subr.bf16.mxu0 0
    %208 = vmatpush1.bf16.msra.mxu0 0
    %209 = vmatprep.subr.bf16.mxu0 0
    %210 = vmatpush1.bf16.msra.mxu0 0
    %211 = vmatprep.subr.bf16.mxu0 0
    %212 = vmatpush1.bf16.msra.mxu0 0
    %213 = vmatprep.subr.bf16.mxu0 0
    %214 = vmatpush1.bf16.msra.mxu0 0
    %215 = vmatprep.mubr.bf16.mxu0 0
    %216 = vmatmul.mubr.bf16.gmra.mrb[0].mxu0 %v134
    %v217 = vpop.f32.mrb[0].mxu0
    %v218 = vadd.f32 0.0, %v217
    %v219 = vpop.f32.mrb[0].mxu0
    %v220 = vpop.f32.mrb[0].mxu0
    %v221 = vpop.f32.mrb[0].mxu0
    %222 = vdwg.mxu0
    %223 = vst [vmem:[#allocation8] sm:$0xff] %v218
    %vm224 = vcmp.gt.f32.partialorder %v72, 0.2
    %vm225 = vcmp.gt.f32.partialorder %v73, 0.2
    %vm226 = vcmp.gt.f32.partialorder %v74, 0.2
    %vm227 = vcmp.le.f32.partialorder %v72, 0.4
    %vm228 = vcmp.le.f32.partialorder %v73, 0.4
    %vm229 = vcmp.le.f32.partialorder %v74, 0.4
    %vm230 = vmand %vm224, %vm227
    %vm231 = vmand %vm225, %vm228
    %vm232 = vmand %vm226, %vm229
    %v233 = vsel %vm230, 1, 0
    %v234 = vsel %vm231, 1, 0
    %v235 = vsel %vm232, 1, 0
    %v236 = vcvt.s32.f32 %v233
    %v237 = vcvt.s32.f32 %v234
    %v238 = vcvt.s32.f32 %v235
    %v239 = vpack.c.bf16 %v237, %v236
    %v240 = vpack.c.bf16 %v238, %v238
    %v242 = vsel %vm90, %v240, 0
    %244 = vmatprep.subr.bf16.mxu0 0
    %245 = vmatpush1.bf16.msra.mxu0 %v239
    %246 = vmatprep.subr.bf16.mxu0 0
    %247 = vmatpush1.bf16.msra.mxu0 %v242
    %248 = vmatprep.subr.bf16.mxu0 0
    %249 = vmatpush1.bf16.msra.mxu0 0
    %250 = vmatprep.subr.bf16.mxu0 0
    %251 = vmatpush1.bf16.msra.mxu0 0
    %252 = vmatprep.subr.bf16.mxu0 0
    %253 = vmatpush1.bf16.msra.mxu0 0
    %254 = vmatprep.subr.bf16.mxu0 0
    %255 = vmatpush1.bf16.msra.mxu0 0
    %256 = vmatprep.subr.bf16.mxu0 0
    %257 = vmatpush1.bf16.msra.mxu0 0
    %258 = vmatprep.subr.bf16.mxu0 0
    %259 = vmatpush1.bf16.msra.mxu0 0
    %260 = vmatprep.subr.bf16.mxu0 0
    %261 = vmatpush1.bf16.msra.mxu0 0
    %262 = vmatprep.subr.bf16.mxu0 0
    %263 = vmatpush1.bf16.msra.mxu0 0
    %264 = vmatprep.subr.bf16.mxu0 0
    %265 = vmatpush1.bf16.msra.mxu0 0
    %266 = vmatprep.subr.bf16.mxu0 0
    %267 = vmatpush1.bf16.msra.mxu0 0
    %268 = vmatprep.subr.bf16.mxu0 0
    %269 = vmatpush1.bf16.msra.mxu0 0
    %270 = vmatprep.subr.bf16.mxu0 0
    %271 = vmatpush1.bf16.msra.mxu0 0
    %272 = vmatprep.subr.bf16.mxu0 0
    %273 = vmatpush1.bf16.msra.mxu0 0
    %274 = vmatprep.subr.bf16.mxu0 0
    %275 = vmatpush1.bf16.msra.mxu0 0
    %276 = vmatprep.mubr.bf16.mxu0 0
    %277 = vmatmul.mubr.bf16.gmra.mrb[0].mxu0 %v88
    %v278 = vpop.f32.mrb[0].mxu0
    %v279 = vadd.f32 0.0, %v278
    %v280 = vpop.f32.mrb[0].mxu0
    %v281 = vpop.f32.mrb[0].mxu0
    %v282 = vpop.f32.mrb[0].mxu0
    %283 = vdwg.mxu0
    %v284 = vpack.c.bf16 %v279, %v279
    %285 = vmatprep.subr.bf16.mxu0 0
    %286 = vmatpush1.bf16.msra.mxu0 %v167
    %287 = vmatprep.subr.bf16.mxu0 0
    %288 = vmatpush1.bf16.msra.mxu0 %v168
    %289 = vmatprep.subr.bf16.mxu0 0
    %290 = vmatpush1.bf16.msra.mxu0 %v169
    %291 = vmatprep.subr.bf16.mxu0 0
    %292 = vmatpush1.bf16.msra.mxu0 %v170
    %293 = vmatprep.subr.bf16.mxu0 0
    %294 = vmatpush1.bf16.msra.mxu0 %v171
    %295 = vmatprep.subr.bf16.mxu0 0
    %296 = vmatpush1.bf16.msra.mxu0 %v172
    %297 = vmatprep.subr.bf16.mxu0 0
    %298 = vmatpush1.bf16.msra.mxu0 %v173
    %299 = vmatprep.subr.bf16.mxu0 0
    %300 = vmatpush1.bf16.msra.mxu0 %v174
    %301 = vmatprep.subr.bf16.mxu0 0
    %302 = vmatpush1.bf16.msra.mxu0 0
    %303 = vmatprep.subr.bf16.mxu0 0
    %304 = vmatpush1.bf16.msra.mxu0 0
    %305 = vmatprep.subr.bf16.mxu0 0
    %306 = vmatpush1.bf16.msra.mxu0 0
    %307 = vmatprep.subr.bf16.mxu0 0
    %308 = vmatpush1.bf16.msra.mxu0 0
    %309 = vmatprep.subr.bf16.mxu0 0
    %310 = vmatpush1.bf16.msra.mxu0 0
    %311 = vmatprep.subr.bf16.mxu0 0
    %312 = vmatpush1.bf16.msra.mxu0 0
    %313 = vmatprep.subr.bf16.mxu0 0
    %314 = vmatpush1.bf16.msra.mxu0 0
    %315 = vmatprep.subr.bf16.mxu0 0
    %316 = vmatpush1.bf16.msra.mxu0 0
    %317 = vmatprep.mubr.bf16.mxu0 0
    %318 = vmatmul.mubr.bf16.gmra.mrb[0].mxu0 %v284
    %v319 = vpop.f32.mrb[0].mxu0
    %v320 = vadd.f32 0.0, %v319
    %v321 = vpop.f32.mrb[0].mxu0
    %v322 = vpop.f32.mrb[0].mxu0
    %v323 = vpop.f32.mrb[0].mxu0
    %324 = vdwg.mxu0
    %325 = vst [vmem:[#allocation8 + $0x8] sm:$0xff] %v320
    %vm326 = vcmp.gt.f32.partialorder %v72, 0.4
    %vm327 = vcmp.gt.f32.partialorder %v73, 0.4
    %vm328 = vcmp.gt.f32.partialorder %v74, 0.4
    %vm329 = vcmp.le.f32.partialorder %v72, 0.6
    %vm330 = vcmp.le.f32.partialorder %v73, 0.6
    %vm331 = vcmp.le.f32.partialorder %v74, 0.6
    %vm332 = vmand %vm326, %vm329
    %vm333 = vmand %vm327, %vm330
    %vm334 = vmand %vm328, %vm331
    %v335 = vsel %vm332, 1, 0
    %v336 = vsel %vm333, 1, 0
    %v337 = vsel %vm334, 1, 0
    %v338 = vcvt.s32.f32 %v335
    %v339 = vcvt.s32.f32 %v336
    %v340 = vcvt.s32.f32 %v337
    %v341 = vpack.c.bf16 %v339, %v338
    %v342 = vpack.c.bf16 %v340, %v340
    %v344 = vsel %vm90, %v342, 0
    %346 = vmatprep.subr.bf16.mxu0 0
    %347 = vmatpush1.bf16.msra.mxu0 %v341
    %348 = vmatprep.subr.bf16.mxu0 0
    %349 = vmatpush1.bf16.msra.mxu0 %v344
    %350 = vmatprep.subr.bf16.mxu0 0
    %351 = vmatpush1.bf16.msra.mxu0 0
    %352 = vmatprep.subr.bf16.mxu0 0
    %353 = vmatpush1.bf16.msra.mxu0 0
    %354 = vmatprep.subr.bf16.mxu0 0
    %355 = vmatpush1.bf16.msra.mxu0 0
    %356 = vmatprep.subr.bf16.mxu0 0
    %357 = vmatpush1.bf16.msra.mxu0 0
    %358 = vmatprep.subr.bf16.mxu0 0
    %359 = vmatpush1.bf16.msra.mxu0 0
    %360 = vmatprep.subr.bf16.mxu0 0
    %361 = vmatpush1.bf16.msra.mxu0 0
    %362 = vmatprep.subr.bf16.mxu0 0
    %363 = vmatpush1.bf16.msra.mxu0 0
    %364 = vmatprep.subr.bf16.mxu0 0
    %365 = vmatpush1.bf16.msra.mxu0 0
    %366 = vmatprep.subr.bf16.mxu0 0
    %367 = vmatpush1.bf16.msra.mxu0 0
    %368 = vmatprep.subr.bf16.mxu0 0
    %369 = vmatpush1.bf16.msra.mxu0 0
    %370 = vmatprep.subr.bf16.mxu0 0
    %371 = vmatpush1.bf16.msra.mxu0 0
    %372 = vmatprep.subr.bf16.mxu0 0
    %373 = vmatpush1.bf16.msra.mxu0 0
    %374 = vmatprep.subr.bf16.mxu0 0
    %375 = vmatpush1.bf16.msra.mxu0 0
    %376 = vmatprep.subr.bf16.mxu0 0
    %377 = vmatpush1.bf16.msra.mxu0 0
    %378 = vmatprep.mubr.bf16.mxu0 0
    %379 = vmatmul.mubr.bf16.gmra.mrb[0].mxu0 %v88
    %v380 = vpop.f32.mrb[0].mxu0
    %v381 = vadd.f32 0.0, %v380
    %v382 = vpop.f32.mrb[0].mxu0
    %v383 = vpop.f32.mrb[0].mxu0
    %v384 = vpop.f32.mrb[0].mxu0
    %385 = vdwg.mxu0
    %v386 = vpack.c.bf16 %v381, %v381
    %387 = vmatprep.subr.bf16.mxu0 0
    %388 = vmatpush1.bf16.msra.mxu0 %v167
    %389 = vmatprep.subr.bf16.mxu0 0
    %390 = vmatpush1.bf16.msra.mxu0 %v168
    %391 = vmatprep.subr.bf16.mxu0 0
    %392 = vmatpush1.bf16.msra.mxu0 %v169
    %393 = vmatprep.subr.bf16.mxu0 0
    %394 = vmatpush1.bf16.msra.mxu0 %v170
    %395 = vmatprep.subr.bf16.mxu0 0
    %396 = vmatpush1.bf16.msra.mxu0 %v171
    %397 = vmatprep.subr.bf16.mxu0 0
    %398 = vmatpush1.bf16.msra.mxu0 %v172
    %399 = vmatprep.subr.bf16.mxu0 0
    %400 = vmatpush1.bf16.msra.mxu0 %v173
    %401 = vmatprep.subr.bf16.mxu0 0
    %402 = vmatpush1.bf16.msra.mxu0 %v174
    %403 = vmatprep.subr.bf16.mxu0 0
    %404 = vmatpush1.bf16.msra.mxu0 0
    %405 = vmatprep.subr.bf16.mxu0 0
    %406 = vmatpush1.bf16.msra.mxu0 0
    %407 = vmatprep.subr.bf16.mxu0 0
    %408 = vmatpush1.bf16.msra.mxu0 0
    %409 = vmatprep.subr.bf16.mxu0 0
    %410 = vmatpush1.bf16.msra.mxu0 0
    %411 = vmatprep.subr.bf16.mxu0 0
    %412 = vmatpush1.bf16.msra.mxu0 0
    %413 = vmatprep.subr.bf16.mxu0 0
    %414 = vmatpush1.bf16.msra.mxu0 0
    %415 = vmatprep.subr.bf16.mxu0 0
    %416 = vmatpush1.bf16.msra.mxu0 0
    %417 = vmatprep.subr.bf16.mxu0 0
    %418 = vmatpush1.bf16.msra.mxu0 0
    %419 = vmatprep.mubr.bf16.mxu0 0
    %420 = vmatmul.mubr.bf16.gmra.mrb[0].mxu0 %v386
    %v421 = vpop.f32.mrb[0].mxu0
    %v422 = vadd.f32 0.0, %v421
    %v423 = vpop.f32.mrb[0].mxu0
    %v424 = vpop.f32.mrb[0].mxu0
    %v425 = vpop.f32.mrb[0].mxu0
    %426 = vdwg.mxu0
    %427 = vst [vmem:[#allocation8 + $0x10] sm:$0xff] %v422
    %vm428 = vcmp.gt.f32.partialorder %v72, 0.6
    %vm429 = vcmp.gt.f32.partialorder %v73, 0.6
    %vm430 = vcmp.gt.f32.partialorder %v74, 0.6
    %v431 = vsel %vm428, 1, 0
    %v432 = vsel %vm429, 1, 0
    %v433 = vsel %vm430, 1, 0
    %v434 = vcvt.s32.f32 %v431
    %v435 = vcvt.s32.f32 %v432
    %v436 = vcvt.s32.f32 %v433
    %v437 = vpack.c.bf16 %v435, %v434
    %v438 = vpack.c.bf16 %v436, %v436
    %v440 = vsel %vm90, %v438, 0
    %442 = vmatprep.subr.bf16.mxu0 0
    %443 = vmatpush1.bf16.msra.mxu0 %v437
    %444 = vmatprep.subr.bf16.mxu0 0
    %445 = vmatpush1.bf16.msra.mxu0 %v440
    %446 = vmatprep.subr.bf16.mxu0 0
    %447 = vmatpush1.bf16.msra.mxu0 0
    %448 = vmatprep.subr.bf16.mxu0 0
    %449 = vmatpush1.bf16.msra.mxu0 0
    %450 = vmatprep.subr.bf16.mxu0 0
    %451 = vmatpush1.bf16.msra.mxu0 0
    %452 = vmatprep.subr.bf16.mxu0 0
    %453 = vmatpush1.bf16.msra.mxu0 0
    %454 = vmatprep.subr.bf16.mxu0 0
    %455 = vmatpush1.bf16.msra.mxu0 0
    %456 = vmatprep.subr.bf16.mxu0 0
    %457 = vmatpush1.bf16.msra.mxu0 0
    %458 = vmatprep.subr.bf16.mxu0 0
    %459 = vmatpush1.bf16.msra.mxu0 0
    %460 = vmatprep.subr.bf16.mxu0 0
    %461 = vmatpush1.bf16.msra.mxu0 0
    %462 = vmatprep.subr.bf16.mxu0 0
    %463 = vmatpush1.bf16.msra.mxu0 0
    %464 = vmatprep.subr.bf16.mxu0 0
    %465 = vmatpush1.bf16.msra.mxu0 0
    %466 = vmatprep.subr.bf16.mxu0 0
    %467 = vmatpush1.bf16.msra.mxu0 0
    %468 = vmatprep.subr.bf16.mxu0 0
    %469 = vmatpush1.bf16.msra.mxu0 0
    %470 = vmatprep.subr.bf16.mxu0 0
    %471 = vmatpush1.bf16.msra.mxu0 0
    %472 = vmatprep.subr.bf16.mxu0 0
    %473 = vmatpush1.bf16.msra.mxu0 0
    %474 = vmatprep.mubr.bf16.mxu0 0
    %475 = vmatmul.mubr.bf16.gmra.mrb[0].mxu0 %v88
    %v476 = vpop.f32.mrb[0].mxu0
    %v477 = vadd.f32 0.0, %v476
    %v478 = vpop.f32.mrb[0].mxu0
    %v479 = vpop.f32.mrb[0].mxu0
    %v480 = vpop.f32.mrb[0].mxu0
    %481 = vdwg.mxu0
    %v482 = vpack.c.bf16 %v477, %v477
    %483 = vmatprep.subr.bf16.mxu0 0
    %484 = vmatpush1.bf16.msra.mxu0 %v167
    %485 = vmatprep.subr.bf16.mxu0 0
    %486 = vmatpush1.bf16.msra.mxu0 %v168
    %487 = vmatprep.subr.bf16.mxu0 0
    %488 = vmatpush1.bf16.msra.mxu0 %v169
    %489 = vmatprep.subr.bf16.mxu0 0
    %490 = vmatpush1.bf16.msra.mxu0 %v170
    %491 = vmatprep.subr.bf16.mxu0 0
    %492 = vmatpush1.bf16.msra.mxu0 %v171
    %493 = vmatprep.subr.bf16.mxu0 0
    %494 = vmatpush1.bf16.msra.mxu0 %v172
    %495 = vmatprep.subr.bf16.mxu0 0
    %496 = vmatpush1.bf16.msra.mxu0 %v173
    %497 = vmatprep.subr.bf16.mxu0 0
    %498 = vmatpush1.bf16.msra.mxu0 %v174
    %499 = vmatprep.subr.bf16.mxu0 0
    %500 = vmatpush1.bf16.msra.mxu0 0
    %501 = vmatprep.subr.bf16.mxu0 0
    %502 = vmatpush1.bf16.msra.mxu0 0
    %503 = vmatprep.subr.bf16.mxu0 0
    %504 = vmatpush1.bf16.msra.mxu0 0
    %505 = vmatprep.subr.bf16.mxu0 0
    %506 = vmatpush1.bf16.msra.mxu0 0
    %507 = vmatprep.subr.bf16.mxu0 0
    %508 = vmatpush1.bf16.msra.mxu0 0
    %509 = vmatprep.subr.bf16.mxu0 0
    %510 = vmatpush1.bf16.msra.mxu0 0
    %511 = vmatprep.subr.bf16.mxu0 0
    %512 = vmatpush1.bf16.msra.mxu0 0
    %513 = vmatprep.subr.bf16.mxu0 0
    %514 = vmatpush1.bf16.msra.mxu0 0
    %515 = vmatprep.mubr.bf16.mxu0 0
    %516 = vmatmul.mubr.bf16.gmra.mrb[0].mxu0 %v482
    %v517 = vpop.f32.mrb[0].mxu0
    %v518 = vadd.f32 0.0, %v517
    %v519 = vpop.f32.mrb[0].mxu0
    %v520 = vpop.f32.mrb[0].mxu0
    %v521 = vpop.f32.mrb[0].mxu0
    %522 = vdwg.mxu0
    %523 = vst [vmem:[#allocation8 + $0x18] sm:$0xff] %v518
    // Predicated region
    $region26: #{tpu_custom_call.1} parent=1 // pred_check
      _
    $region27: #{tpu_custom_call.1} parent=1 // pred_check_branch
      %525 = sbr.rel (0) target = $region29
    $region28: #{tpu_custom_call.1} parent=1 // pred_region
      %s527 = ssub.s32 512, 512
      %528 = vsyncadd [#allocation4], %s527
      %s530 = sshll.u32 [#allocation8], 4
      %s531 = int_to_ptr.vmem [resolvable:$true] %s530
      %533 = dma.vmem_to_hbm [thread:$0]  %s531, 512, %s3, [#allocation4]
    $region29: #{tpu_custom_call.1} parent=1 // pred_fallthru
      _
    // Predicated region
    $region30: #{tpu_custom_call.1} parent=1 // pred_check
      _
    $region31: #{tpu_custom_call.1} parent=1 // pred_check_branch
      %535 = sbr.rel (0) target = $region33
    $region32: #{tpu_custom_call.1} parent=1 // pred_region
      %536 = dma.done [#allocation4], 512
    $region33: #{tpu_custom_call.1} parent=1 // pred_fallthru
      _
    %537 = vsyncpa [#allocation3], 1
    %538 = vsyncpa [#allocation6], 1
    %539 = vsyncpa [#allocation4], 1

</llo_original>
